<compile_context>
chip_gen: v6e
topology: v6e:2x2x1
jax: 0.10.0
libtpu: 0.0.40
codegen_flags: <defaults>
</compile_context>

<pallas_src>
import jax
import jax.numpy as jnp
from jax.experimental import pallas as pl
from jax.experimental.pallas import tpu as pltpu

_EPS = 1e-5  # PyTorch BatchNorm1d default eps


def _round_up(x: int, m: int) -> int:
    return ((x + m - 1) // m) * m


# -----------------------------------------------------------------------------
# Kernel: one grid step == one [Linear -> BN(train) -> ReLU] layer.
# -----------------------------------------------------------------------------
def _bn_mlp_layer_kernel(x_ref, w_ref, gb_ref, o_ref, act_ref):
    """x_ref  : (B, PW)      f32, zero-padded input activations (read at l==0)
       w_ref  : (1, PW, PW)  bf16, this layer's pre-transposed weight (x @ w)
       gb_ref : (1, 2, PW)   f32, row 0 = gamma, row 1 = beta (zero-padded)
       o_ref  : (B, PW)      f32, lane-dense output (written at last layer)
       act_ref: (B, PW)      f32 VMEM scratch carrying activations across layers
    """
    l = pl.program_id(0)

    @pl.when(l == 0)
    def _():
        act_ref[...] = x_ref[...]

    x = act_ref[...]

    # Linear (bias omitted: train-mode BN cancels a per-feature constant).
    # bf16 operands on the MXU, f32 accumulation.
    y = jnp.dot(x.astype(jnp.bfloat16), w_ref[0],
                preferred_element_type=jnp.float32)

    # BatchNorm1d training-mode statistics in ONE pass over y:
    # biased variance via E[y^2] - mean^2 (f32 accumulation, clamped >= 0).
    mean = jnp.mean(y, axis=0, keepdims=True)
    mean_sq = jnp.mean(y * y, axis=0, keepdims=True)
    var = jnp.maximum(mean_sq - mean * mean, 0.0)

    # Fold the BN affine into one scale/shift; rsqrt rides the EUP slot.
    scale = gb_ref[0, 0:1, :] * jax.lax.rsqrt(var + _EPS)
    shift = gb_ref[0, 1:2, :] - mean * scale

    # Normalize + affine + ReLU fused (2 VPU ops + max per element).
    out = jnp.maximum(y * scale + shift, 0.0)
    act_ref[...] = out

    @pl.when(l == pl.num_programs(0) - 1)
    def _():
        o_ref[...] = out


# -----------------------------------------------------------------------------
# Parameter initialization (orthogonal, gain sqrt(2), mirrors orthogonal_init;
# BatchNorm affine weight=1, bias=0).  Weights are pre-transposed to (in, out),
# zero-padded to a common lane-dense width PW, stacked across layers, bf16.
# -----------------------------------------------------------------------------
def orthogonal(key, out_dim, in_dim, gain):
    rows, cols = max(out_dim, in_dim), min(out_dim, in_dim)
    a = jax.random.normal(key, (rows, cols), dtype=jnp.float32)
    q, r = jnp.linalg.qr(a)
    q = q * jnp.sign(jnp.diag(r))  # make the decomposition unique
    if out_dim < in_dim:
        q = q.T
    return gain * q[:out_dim, :in_dim]


def init_bn_mlp_params(key, input_dim, hidden_dim):
    dims = (input_dim,) + tuple(hidden_dim)
    num_layers = len(hidden_dim)
    pw = _round_up(max(dims), 128)  # lane-dense padded feature width
    gain = float(2.0 ** 0.5)

    # NOTE: the uniform (L, PW, PW) stack is what lets the grid-over-L BlockSpec
    # stream layers; if one layer were much wider than the rest, switch to a
    # flat packed buffer with scalar-prefetch offsets instead of padding all
    # layers to the max width.
    w_stack = jnp.zeros((num_layers, pw, pw), jnp.bfloat16)
    gb_stack = jnp.zeros((num_layers, 2, pw), jnp.float32)
    for i in range(num_layers):
        key, sub = jax.random.split(key)
        w = orthogonal(sub, dims[i + 1], dims[i], gain)            # (out, in)
        w_stack = w_stack.at[i, :dims[i], :dims[i + 1]].set(
            w.T.astype(jnp.bfloat16))                              # (in, out)
        gb_stack = gb_stack.at[i, 0, :dims[i + 1]].set(1.0)        # gamma = 1
        # beta stays 0; padded gamma/beta stay 0 (keeps padded columns == 0).
    return {"w": w_stack, "gb": gb_stack, "dims": dims, "padded_width": pw}


# -----------------------------------------------------------------------------
# Forward pass (mirrors BNMLPNetwork.forward)
# -----------------------------------------------------------------------------
def bn_mlp_forward(params, x):
    pw = params["padded_width"]
    out_dim = params["dims"][-1]
    w, gb = params["w"], params["gb"]
    num_layers = w.shape[0]

    # torch.cat(x, dim=1) + zero-pad fused into a single buffer construction
    # (no separate concatenate launch).
    if not isinstance(x, (tuple, list)):
        x = (x,)
    batch = x[0].shape[0]
    x_pad = jnp.zeros((batch, pw), jnp.float32)
    off = 0
    for xi in x:
        x_pad = x_pad.at[:, off:off + xi.shape[1]].set(xi.astype(jnp.float32))
        off += xi.shape[1]

    # VMEM budget: x + out + activation scratch + double-buffered w/gb blocks.
    act_bytes = 3 * batch * pw * 4
    blk_bytes = 2 * (pw * pw * 2 + 2 * pw * 4)
    vmem_limit = min(int(act_bytes + blk_bytes) + (8 << 20), 64 << 20)

    cost = pl.CostEstimate(
        flops=int(2 * batch * pw * pw * num_layers),
        transcendentals=int(num_layers * pw),
        bytes_accessed=int(2 * w.size + 4 * (gb.size + 2 * batch * pw)),
    )

    out_pad = pl.pallas_call(
        _bn_mlp_layer_kernel,
        out_shape=jax.ShapeDtypeStruct((batch, pw), jnp.float32),
        grid_spec=pltpu.PrefetchScalarGridSpec(
            num_scalar_prefetch=0,
            grid=(num_layers,),
            in_specs=[
                pl.BlockSpec((batch, pw), lambda l: (0, 0)),      # x (resident)
                pl.BlockSpec((1, pw, pw), lambda l: (l, 0, 0)),   # layer weight
                pl.BlockSpec((1, 2, pw), lambda l: (l, 0, 0)),    # gamma/beta
            ],
            out_specs=pl.BlockSpec((batch, pw), lambda l: (0, 0)),
            scratch_shapes=[pltpu.VMEM((batch, pw), jnp.float32)],
        ),
        compiler_params=pltpu.CompilerParams(
            dimension_semantics=("arbitrary",),   # layers are sequential
            vmem_limit_bytes=vmem_limit,
        ),
        cost_estimate=cost,
    )(x_pad, w, gb)
    return out_pad[:, :out_dim]


# -----------------------------------------------------------------------------
# Pure-JAX reference (unpadded math, same bf16 matmul / one-pass-var recipe).
# -----------------------------------------------------------------------------
def bn_mlp_reference(params, x):
    if isinstance(x, (tuple, list)):
        x = jnp.concatenate([xi.astype(jnp.float32) for xi in x], axis=1)
    dims = params["dims"]
    h = x
    for i in range(params["w"].shape[0]):
        w_t = params["w"][i, :dims[i], :dims[i + 1]]            # bf16 (in, out)
        gamma = params["gb"][i, 0, :dims[i + 1]]
        beta = params["gb"][i, 1, :dims[i + 1]]
        y = jnp.dot(h.astype(jnp.bfloat16), w_t,
                    preferred_element_type=jnp.float32)
        mean = jnp.mean(y, axis=0, keepdims=True)
        var = jnp.maximum(
            jnp.mean(y * y, axis=0, keepdims=True) - mean * mean, 0.0)
        y = (y - mean) * jax.lax.rsqrt(var + _EPS)
        h = jnp.maximum(gamma * y + beta, 0.0)
    return h


if __name__ == "__main__":
    key = jax.random.PRNGKey(0)
    k_param, k_x1, k_x2 = jax.random.split(key, 3)

    batch = 8
    input_dim = 16                 # tuple of (10, 6) features, concatenated
    hidden_dim = (32, 32)

    params = init_bn_mlp_params(k_param, input_dim, hidden_dim)

    x1 = jax.random.normal(k_x1, (batch, 10), dtype=jnp.float32)
    x2 = jax.random.normal(k_x2, (batch, 6), dtype=jnp.float32)

    out = bn_mlp_forward(params, (x1, x2))
    out = jax.block_until_ready(out)

    ref = bn_mlp_reference(params, (x1, x2))
    assert out.shape == (batch, hidden_dim[-1])
    assert jnp.allclose(out, ref, atol=5e-3, rtol=5e-3), float(
        jnp.max(jnp.abs(out - ref)))

    print("KERNEL_OK")
</pallas_src>

<mosaic_0001>
module attributes {stable_mosaic.version = 11 : i64} {
  func.func @_bn_mlp_layer_kernel(%arg0: i32, %arg1: memref<8x128xf32, #tpu.memory_space<vmem>>, %arg2: memref<1x128x128xbf16, #tpu.memory_space<vmem>>, %arg3: memref<1x2x128xf32, #tpu.memory_space<vmem>>, %arg4: memref<8x128xf32, #tpu.memory_space<vmem>>, %arg5: memref<8x128xf32, #tpu.memory_space<vmem>>) attributes {dimension_semantics = [#tpu.dimension_semantics<arbitrary>], iteration_bounds = array<i64: 2>, scalar_prefetch = 0 : i64, scratch_operands = 1 : i64, tpu.core_type = #tpu.core_type<tc>, window_params = [{pipeline_mode = #tpu.pipeline_mode<synchronous>, transform_indices = @transform_0, window_bounds = array<i64: 8, 128>}, {transform_indices = @transform_1, window_bounds = array<i64: 1, 128, 128>}, {transform_indices = @transform_2, window_bounds = array<i64: 1, 2, 128>}, {pipeline_mode = #tpu.pipeline_mode<synchronous>, transform_indices = @transform_3, window_bounds = array<i64: 8, 128>}]} {
    %c0_i32 = arith.constant 0 : i32
    %0 = arith.cmpi eq, %arg0, %c0_i32 : i32
    %1 = arith.extui %0 : i1 to i32
    %c0_i32_0 = arith.constant 0 : i32
    %2 = arith.cmpi ne, %1, %c0_i32_0 : i32
    scf.if %2 {
      %c0_20 = arith.constant 0 : index
      %c0_21 = arith.constant 0 : index
      %41 = vector.load %arg1[%c0_20, %c0_21] : memref<8x128xf32, #tpu.memory_space<vmem>>, vector<8x128xf32>
      %c0_22 = arith.constant 0 : index
      %c0_23 = arith.constant 0 : index
      %42 = vector.load %arg5[%c0_22, %c0_23] : memref<8x128xf32, #tpu.memory_space<vmem>>, vector<8x128xf32>
      tpu.vector_store %arg5[%c0_22, %c0_23], %41 {strides = array<i32>} : memref<8x128xf32, #tpu.memory_space<vmem>>, vector<8x128xf32>,
    } else {
    }
    %c0 = arith.constant 0 : index
    %c0_1 = arith.constant 0 : index
    %3 = vector.load %arg5[%c0, %c0_1] : memref<8x128xf32, #tpu.memory_space<vmem>>, vector<8x128xf32>
    %4 = arith.truncf %3 : vector<8x128xf32> to vector<8x128xbf16>
    %c0_2 = arith.constant 0 : index
    %c0_3 = arith.constant 0 : index
    %c0_4 = arith.constant 0 : index
    %5 = vector.load %arg2[%c0_2, %c0_3, %c0_4] : memref<1x128x128xbf16, #tpu.memory_space<vmem>>, vector<1x128x128xbf16>
    %6 = vector.shape_cast %5 : vector<1x128x128xbf16> to vector<128x128xbf16>
    %cst = arith.constant dense<0.000000e+00> : vector<8x128xf32>
    %7 = tpu.matmul %4, %6, %cst {dimension_numbers = #tpu.dot_dimension_numbers<[1], [0], [0], [1], [0, 0, 1, 1], [], []>} : vector<8x128xbf16>, vector<128x128xbf16>, vector<8x128xf32> -> vector<8x128xf32>
    %cst_5 = arith.constant dense<0.000000e+00> : vector<128xf32>
    %8 = vector.multi_reduction <add>, %7, %cst_5 [0] : vector<8x128xf32> to vector<128xf32>
    %9 = vector.shape_cast %8 : vector<128xf32> to vector<1x128xf32>
    %cst_6 = arith.constant 8.000000e+00 : f32
    %10 = vector.broadcast %cst_6 : f32 to vector<1x128xf32>
    %11 = arith.divf %9, %10 : vector<1x128xf32>
    %12 = arith.mulf %7, %7 : vector<8x128xf32>
    %cst_7 = arith.constant dense<0.000000e+00> : vector<128xf32>
    %13 = vector.multi_reduction <add>, %12, %cst_7 [0] : vector<8x128xf32> to vector<128xf32>
    %14 = vector.shape_cast %13 : vector<128xf32> to vector<1x128xf32>
    %cst_8 = arith.constant 8.000000e+00 : f32
    %15 = vector.broadcast %cst_8 : f32 to vector<1x128xf32>
    %16 = arith.divf %14, %15 : vector<1x128xf32>
    %17 = arith.mulf %11, %11 : vector<1x128xf32>
    %18 = arith.subf %16, %17 : vector<1x128xf32>
    %cst_9 = arith.constant 0.000000e+00 : f32
    %19 = vector.broadcast %cst_9 : f32 to vector<1x128xf32>
    %20 = arith.maximumf %18, %19 : vector<1x128xf32>
    %c0_10 = arith.constant 0 : index
    %c0_11 = arith.constant 0 : index
    %c0_12 = arith.constant 0 : index
    %21 = vector.load %arg3[%c0_10, %c0_11, %c0_12] : memref<1x2x128xf32, #tpu.memory_space<vmem>>, vector<1x1x128xf32>
    %22 = vector.shape_cast %21 : vector<1x1x128xf32> to vector<1x128xf32>
    %cst_13 = arith.constant 9.99999974E-6 : f32
    %23 = vector.broadcast %cst_13 : f32 to vector<1x128xf32>
    %24 = arith.addf %20, %23 : vector<1x128xf32>
    %25 = math.rsqrt %24 : vector<1x128xf32>
    %26 = arith.mulf %22, %25 : vector<1x128xf32>
    %c0_14 = arith.constant 0 : index
    %c1 = arith.constant 1 : index
    %c0_15 = arith.constant 0 : index
    %27 = vector.load %arg3[%c0_14, %c1, %c0_15] : memref<1x2x128xf32, #tpu.memory_space<vmem>>, vector<1x1x128xf32>
    %28 = vector.shape_cast %27 : vector<1x1x128xf32> to vector<1x128xf32>
    %29 = arith.mulf %11, %26 : vector<1x128xf32>
    %30 = arith.subf %28, %29 : vector<1x128xf32>
    %31 = vector.broadcast %26 : vector<1x128xf32> to vector<8x128xf32>
    %32 = arith.mulf %7, %31 : vector<8x128xf32>
    %33 = vector.broadcast %30 : vector<1x128xf32> to vector<8x128xf32>
    %34 = arith.addf %32, %33 : vector<8x128xf32>
    %cst_16 = arith.constant 0.000000e+00 : f32
    %35 = vector.broadcast %cst_16 : f32 to vector<8x128xf32>
    %36 = arith.maximumf %34, %35 : vector<8x128xf32>
    %c0_17 = arith.constant 0 : index
    %c0_18 = arith.constant 0 : index
    %37 = vector.load %arg5[%c0_17, %c0_18] : memref<8x128xf32, #tpu.memory_space<vmem>>, vector<8x128xf32>
    tpu.vector_store %arg5[%c0_17, %c0_18], %36 {strides = array<i32>} : memref<8x128xf32, #tpu.memory_space<vmem>>, vector<8x128xf32>,
    %c1_i32 = arith.constant 1 : i32
    %38 = arith.cmpi eq, %arg0, %c1_i32 : i32
    %39 = arith.extui %38 : i1 to i32
    %c0_i32_19 = arith.constant 0 : i32
    %40 = arith.cmpi ne, %39, %c0_i32_19 : i32
    scf.if %40 {
      %c0_20 = arith.constant 0 : index
      %c0_21 = arith.constant 0 : index
      %41 = vector.load %arg4[%c0_20, %c0_21] : memref<8x128xf32, #tpu.memory_space<vmem>>, vector<8x128xf32>
      tpu.vector_store %arg4[%c0_20, %c0_21], %36 {strides = array<i32>} : memref<8x128xf32, #tpu.memory_space<vmem>>, vector<8x128xf32>,
    } else {
    }
    return
  }
  func.func @transform_0(%arg0: i32) -> (i32, i32) {
    %c0_i32 = arith.constant 0 : i32
    %c0_i32_0 = arith.constant 0 : i32
    %c0_i32_1 = arith.constant 0 : i32
    return %c0_i32, %c0_i32_0 : i32, i32
  }
  func.func @transform_1(%arg0: i32) -> (i32, i32, i32) {
    %c0_i32 = arith.constant 0 : i32
    %c0_i32_0 = arith.constant 0 : i32
    %c0_i32_1 = arith.constant 0 : i32
    return %arg0, %c0_i32, %c0_i32_0 : i32, i32, i32
  }
  func.func @transform_2(%arg0: i32) -> (i32, i32, i32) {
    %c0_i32 = arith.constant 0 : i32
    %c0_i32_0 = arith.constant 0 : i32
    %c0_i32_1 = arith.constant 0 : i32
    return %arg0, %c0_i32, %c0_i32_0 : i32, i32, i32
  }
  func.func @transform_3(%arg0: i32) -> (i32, i32) {
    %c0_i32 = arith.constant 0 : i32
    %c0_i32_0 = arith.constant 0 : i32
    %c0_i32_1 = arith.constant 0 : i32
    return %c0_i32, %c0_i32_0 : i32, i32
  }
}

</mosaic_0001>

<llo_original>
// kernel: tpu_custom_call.1
$region0: #{tpu_custom_call.1}
  #allocation0 [shape = 'u32[]', space=smem, size = 0x4, offset = 0x4, fixed_abs, tag = 'smem constant byte address 0x4 - core index']
  #allocation1 [shape = 'u32[144,128]{1,0:T(1,128)}', space=vmem, size = 0x12000, scoped, tag = 'internal scratch']
  #allocation2 [shape = 'f32[8,128]{1,0:T(8,128)}', space=vmem, size = 0x1000, scoped, tag = 'scratch operand']
  %s0 = inlined_call_operand.hbm [shape: f32[8,128], index: 0, kind: input, shape index: {}]
  %s1 = inlined_call_operand.hbm [shape: bf16[2,128,128], index: 1, kind: input, shape index: {}]
  %s2 = inlined_call_operand.hbm [shape: f32[2,2,128], index: 2, kind: input, shape index: {}]
  %s3 = inlined_call_operand.hbm [shape: f32[8,128], index: 3, kind: output, shape index: {}]
  %s4 = sld [smem:[#allocation0]]
  $region65: #{tpu_custom_call.1} parent=0
    _
  %s6 = ssub.s32 1, %s4
  %s7 = scalar_select 0, %s6, %s4
  $region1: #{tpu_custom_call.1} parent=0
    #allocation3 [shape = 'u8[4096]{0}', space=vmem, size = 0x1000, scoped, tag = 'input window, operand 0, single buffered']
    #allocation4 [shape = 's32[2]{0}', space=sflag, size = 0x8, scoped, tag = 'scoped memory for tpu_custom_call.1']
    #allocation5 [shape = 's32[2]{0}', space=sflag, size = 0x8, scoped, tag = 'scoped memory for tpu_custom_call.1']
    #allocation6 [shape = 'u8[65536]{0}', space=vmem, size = 0x10000, scoped, tag = 'input window, operand 1']
    #allocation7 [shape = 's32[2]{0}', space=sflag, size = 0x8, scoped, tag = 'scoped memory for tpu_custom_call.1']
    #allocation8 [shape = 'u8[2048]{0}', space=vmem, size = 0x800, scoped, tag = 'input window, operand 2']
    #allocation9 [shape = 'u8[4096]{0}', space=vmem, size = 0x1000, scoped, tag = 'output window, operand 0, single buffered']
    %8 = vsyncpa [#allocation4], 0
    %9 = vsyncpa [#allocation7], 0
    %s10 = scalar_lea.sflag [#allocation7], 1
    %11 = vsyncpa %s10, 0
    %12 = vsyncpa [#allocation5], 0
    loop: start=0, step=1, limit=4
    $region2: #{tpu_custom_call.1} parent=1 // loop_pre_header
      _
    $region3: #{tpu_custom_call.1} parent=1 // loop_header
      %s14 = sphi 0, %s18
      %p15 = scmp.ge.s32.totalorder %s14, 4
      %s22 = sphi 0, %s22
      %s24 = sphi 0, %s22
      %s25 = sphi 0, %s24
      %s39 = sphi 0, %s25
      %s45 = sphi 0, %s47
      %s48 = sphi 0, %s45
      %s49 = sphi 0, %s48
      %s65 = sphi 0, %s49
      %s71 = sphi 0, %s73
      %s74 = sphi 0, %s71
      %s75 = sphi 0, %s74
      %s91 = sphi 0, %s75
      %s95 = sphi 0, %s95
      %s97 = sphi 0, %s95
      %s98 = sphi 0, %s97
      %s112 = sphi 0, %s98
    $region4: #{tpu_custom_call.1} parent=1 // loop_header_branch
      %17 = sbr.rel (%p15) target = $region8
    $region5: #{tpu_custom_call.1} parent=1 // loop_body
      %s19 = ssub.s32 %s14, 1
      %s20 = ssub.s32 %s14, 2
      %s21 = sadd.s32 %s14, 1
      %s23 = sadd.s32 %s22, 1
      %p26 = scmp.eq.s32.totalorder %s14, 1
      %p27 = scmp.ne.s32.totalorder %s22, %s24
      %p28 = scmp.eq.s32.totalorder %s14, 0
      %p29 = por %p27, %p28
      %p30 = scmp.ne.s32.totalorder %s22, %s24
      %p31 = scmp.eq.s32.totalorder %s19, 1
      %p32 = por %p30, %p31
      %p33 = scmp.ne.s32.totalorder %s24, %s25
      %p34 = scmp.eq.s32.totalorder %s19, 0
      %p35 = por %p33, %p34
      %p36 = scmp.ne.s32.totalorder %s24, %s25
      %p37 = scmp.eq.s32.totalorder %s20, 1
      %p38 = por %p36, %p37
      %p40 = scmp.ne.s32.totalorder %s25, %s39
      %p41 = scmp.eq.s32.totalorder %s20, 0
      %p42 = por %p40, %p41
      %s43 = ssub.s32 %s14, %s21
      %p44 = scmp.eq.s32.totalorder %s43, 0
      %s46 = sadd.s32 %s45, 1
      %s47 = scalar_select %p44, %s45, %s46
      %p50 = pneg %p44
      %p51 = scmp.eq.s32.totalorder %s14, 1
      %p52 = por %p50, %p51
      %p53 = scmp.ne.s32.totalorder %s45, %s48
      %p54 = scmp.eq.s32.totalorder %s14, 0
      %p55 = por %p53, %p54
      %p56 = scmp.ne.s32.totalorder %s45, %s48
      %p57 = scmp.eq.s32.totalorder %s19, 1
      %p58 = por %p56, %p57
      %p59 = scmp.ne.s32.totalorder %s48, %s49
      %p60 = scmp.eq.s32.totalorder %s19, 0
      %p61 = por %p59, %p60
      %p62 = scmp.ne.s32.totalorder %s48, %s49
      %p63 = scmp.eq.s32.totalorder %s20, 1
      %p64 = por %p62, %p63
      %p66 = scmp.ne.s32.totalorder %s49, %s65
      %p67 = scmp.eq.s32.totalorder %s20, 0
      %p68 = por %p66, %p67
      %s69 = ssub.s32 %s14, %s21
      %p70 = scmp.eq.s32.totalorder %s69, 0
      %s72 = sadd.s32 %s71, 1
      %s73 = scalar_select %p70, %s71, %s72
      %p76 = pneg %p70
      %p77 = scmp.eq.s32.totalorder %s14, 1
      %p78 = por %p76, %p77
      %p79 = scmp.ne.s32.totalorder %s71, %s74
      %p80 = scmp.eq.s32.totalorder %s14, 0
      %p81 = por %p79, %p80
      %p82 = scmp.ne.s32.totalorder %s71, %s74
      %p83 = scmp.eq.s32.totalorder %s19, 1
      %p84 = por %p82, %p83
      %p85 = scmp.ne.s32.totalorder %s74, %s75
      %p86 = scmp.eq.s32.totalorder %s19, 0
      %p87 = por %p85, %p86
      %p88 = scmp.ne.s32.totalorder %s74, %s75
      %p89 = scmp.eq.s32.totalorder %s20, 1
      %p90 = por %p88, %p89
      %p92 = scmp.ne.s32.totalorder %s75, %s91
      %p93 = scmp.eq.s32.totalorder %s20, 0
      %p94 = por %p92, %p93
      %s96 = sadd.s32 %s95, 1
      %p99 = scmp.eq.s32.totalorder %s14, 1
      %p100 = scmp.ne.s32.totalorder %s95, %s97
      %p101 = scmp.eq.s32.totalorder %s14, 0
      %p102 = por %p100, %p101
      %p103 = scmp.ne.s32.totalorder %s95, %s97
      %p104 = scmp.eq.s32.totalorder %s19, 1
      %p105 = por %p103, %p104
      %p106 = scmp.ne.s32.totalorder %s97, %s98
      %p107 = scmp.eq.s32.totalorder %s19, 0
      %p108 = por %p106, %p107
      %p109 = scmp.ne.s32.totalorder %s97, %s98
      %p110 = scmp.eq.s32.totalorder %s20, 1
      %p111 = por %p109, %p110
      %p113 = scmp.ne.s32.totalorder %s98, %s112
      %p114 = scmp.eq.s32.totalorder %s20, 0
      %p115 = por %p113, %p114
      %p116 = scmp.le.s32.totalorder 1, %s14
      %p117 = scmp.lt.s32.totalorder %s14, 3
      %p118 = pnand %p116, %p117
      %p119 = pneg %p118
      // Predicated region
      $region9: #{tpu_custom_call.1} parent=5 // pred_check
        _
      $region10: #{tpu_custom_call.1} parent=5 // pred_check_branch
        %121 = sbr.rel (%p118) target = $region12
      $region11: #{tpu_custom_call.1} parent=5 // pred_region
        %s122 = ssub.s32 %s14, 1
        // Predicated region
        $region13: #{tpu_custom_call.1} parent=11 // pred_check
          %p123 = pneg %p35
        $region14: #{tpu_custom_call.1} parent=11 // pred_check_branch
          %125 = sbr.rel (%p123) target = $region16
        $region15: #{tpu_custom_call.1} parent=11 // pred_region
          %s127 = ssub.s32 128, 128
          %128 = vsyncadd [#allocation4], %s127
          %s130 = sshll.u32 [#allocation3], 4
          %s131 = int_to_ptr.vmem [resolvable:$true] %s130
          %133 = dma.hbm_to_vmem [thread:$0]  %s0, 128, %s131, [#allocation4]
        $region16: #{tpu_custom_call.1} parent=11 // pred_fallthru
          _
      $region12: #{tpu_custom_call.1} parent=5 // pred_fallthru
        _
      %p134 = scmp.lt.s32.totalorder %s14, 2
      // Predicated region
      $region17: #{tpu_custom_call.1} parent=5 // pred_check
        %p135 = pneg %p134
      $region18: #{tpu_custom_call.1} parent=5 // pred_check_branch
        %137 = sbr.rel (%p135) target = $region20
      $region19: #{tpu_custom_call.1} parent=5 // pred_region
        // Predicated region
        $region21: #{tpu_custom_call.1} parent=19 // pred_check
          %p138 = pneg %p55
        $region22: #{tpu_custom_call.1} parent=19 // pred_check_branch
          %140 = sbr.rel (%p138) target = $region24
        $region23: #{tpu_custom_call.1} parent=19 // pred_region
          %s141 = sand.u32 %s14, 1
          %s142 = scalar_lea.sflag [#allocation7], %s141
          %s143 = sand.u32 %s45, 1
          %s144 = smul.addr %s143, 64
          %s145 = scalar_lea.vmem [#allocation6], %s144
          %s147 = ssub.s32 1024, 1024
          %148 = vsyncadd %s142, %s147
          %s149 = smul.addr %s14, 16
          %s150 = smul.addr %s149, 64
          %s151 = scalar_lea.hbm %s1, %s150
          %s152 = sshll.u32 %s145, 4
          %s153 = int_to_ptr.vmem [resolvable:$true] %s152
          %158 = dma.hbm_to_vmem [thread:$0]  %s151, 1024, %s153, %s142, 64, 64, 4
        $region24: #{tpu_custom_call.1} parent=19 // pred_fallthru
          _
        // Predicated region
        $region25: #{tpu_custom_call.1} parent=19 // pred_check
          %p159 = pneg %p81
        $region26: #{tpu_custom_call.1} parent=19 // pred_check_branch
          %161 = sbr.rel (%p159) target = $region28
        $region27: #{tpu_custom_call.1} parent=19 // pred_region
          %s162 = sand.u32 %s14, 1
          %s163 = scalar_lea.sflag [#allocation7], %s162
          %s164 = sand.u32 %s71, 1
          %s165 = smul.addr %s164, 2
          %s166 = scalar_lea.vmem [#allocation8], %s165
          %s168 = ssub.s32 32, 32
          %169 = vsyncadd %s163, %s168
          %s170 = smul.addr %s14, 32
          %s171 = scalar_lea.hbm %s2, %s170
          %s173 = sshll.u32 %s166, 4
          %s174 = int_to_ptr.vmem [resolvable:$true] %s173
          %176 = dma.hbm_to_vmem [thread:$0]  %s171, 32, %s174, %s163
        $region28: #{tpu_custom_call.1} parent=19 // pred_fallthru
          _
      $region20: #{tpu_custom_call.1} parent=5 // pred_fallthru
        _
      %p177 = scmp.le.s32.totalorder 1, %s14
      %p178 = scmp.lt.s32.totalorder %s14, 3
      %p179 = pnand %p177, %p178
      %p180 = pneg %p179
      // Predicated region
      $region29: #{tpu_custom_call.1} parent=5 // pred_check
        _
      $region30: #{tpu_custom_call.1} parent=5 // pred_check_branch
        %182 = sbr.rel (%p179) target = $region32
      $region31: #{tpu_custom_call.1} parent=5 // pred_region
        %s183 = ssub.s32 %s14, 1
        // Predicated region
        $region33: #{tpu_custom_call.1} parent=31 // pred_check
          %p184 = pneg %p35
        $region34: #{tpu_custom_call.1} parent=31 // pred_check_branch
          %186 = sbr.rel (%p184) target = $region36
        $region35: #{tpu_custom_call.1} parent=31 // pred_region
          %187 = dma.done [#allocation4], 128
        $region36: #{tpu_custom_call.1} parent=31 // pred_fallthru
          _
        %s188 = sand.u32 %s19, 1
        %s189 = scalar_lea.sflag [#allocation7], %s188
        %s190 = sand.u32 %s48, 1
        %s191 = smul.addr %s190, 64
        %s192 = scalar_lea.vmem [#allocation6], %s191
        // Predicated region
        $region37: #{tpu_custom_call.1} parent=31 // pred_check
          %p193 = pneg %p61
        $region38: #{tpu_custom_call.1} parent=31 // pred_check_branch
          %195 = sbr.rel (%p193) target = $region40
        $region39: #{tpu_custom_call.1} parent=31 // pred_region
          %196 = dma.done %s189, 1024
        $region40: #{tpu_custom_call.1} parent=31 // pred_fallthru
          _
        %s197 = sand.u32 %s19, 1
        %s198 = scalar_lea.sflag [#allocation7], %s197
        %s199 = sand.u32 %s74, 1
        %s200 = smul.addr %s199, 2
        %s201 = scalar_lea.vmem [#allocation8], %s200
        // Predicated region
        $region41: #{tpu_custom_call.1} parent=31 // pred_check
          %p202 = pneg %p87
        $region42: #{tpu_custom_call.1} parent=31 // pred_check_branch
          %204 = sbr.rel (%p202) target = $region44
        $region43: #{tpu_custom_call.1} parent=31 // pred_region
          %205 = dma.done %s198, 32
        $region44: #{tpu_custom_call.1} parent=31 // pred_fallthru
          _
        %p206 = pneg %p35
        %p207 = pneg %p32
        %s208 = sand.u32 %s19, 1
        %s209 = scalar_lea.sflag [#allocation7], %s208
        %s210 = sand.u32 %s48, 1
        %s211 = smul.addr %s210, 64
        %s212 = scalar_lea.vmem [#allocation6], %s211
        %p213 = pneg %p61
        %p214 = pneg %p58
        %s215 = sand.u32 %s19, 1
        %s216 = scalar_lea.sflag [#allocation7], %s215
        %s217 = sand.u32 %s74, 1
        %s218 = smul.addr %s217, 2
        %s219 = scalar_lea.vmem [#allocation8], %s218
        %p220 = pneg %p87
        %p221 = pneg %p84
        %p222 = pneg %p108
        %p223 = pneg %p105
        %p225 = scmp.eq.s32.totalorder %s19, 0
        // Predicated region
        $region45: #{tpu_custom_call.1} parent=31 // pred_check
          %p226 = pneg %p225
        $region46: #{tpu_custom_call.1} parent=31 // pred_check_branch
          %228 = sbr.rel (%p226) target = $region48
        $region47: #{tpu_custom_call.1} parent=31 // pred_region
          %v229 = vld [vmem:[#allocation3] sm:$0xff]
          %230 = vst [vmem:[#allocation2] sm:$0xff] %v229
        $region48: #{tpu_custom_call.1} parent=31 // pred_fallthru
          _
        %v231 = vld [vmem:[#allocation2] sm:$0xff]
        %v232 = vpack.c.bf16 %v231, %v231
        %v233 = vld [vmem:[%s192] sm:$0xf]
        %v234 = vld [vmem:[%s192 + $0x4] sm:$0xf]
        %v235 = vld [vmem:[%s192 + $0x8] sm:$0xf]
        %v236 = vld [vmem:[%s192 + $0xc] sm:$0xf]
        %v237 = vld [vmem:[%s192 + $0x10] sm:$0xf]
        %v238 = vld [vmem:[%s192 + $0x14] sm:$0xf]
        %v239 = vld [vmem:[%s192 + $0x18] sm:$0xf]
        %v240 = vld [vmem:[%s192 + $0x1c] sm:$0xf]
        %v241 = vld [vmem:[%s192 + $0x20] sm:$0xf]
        %v242 = vld [vmem:[%s192 + $0x24] sm:$0xf]
        %v243 = vld [vmem:[%s192 + $0x28] sm:$0xf]
        %v244 = vld [vmem:[%s192 + $0x2c] sm:$0xf]
        %v245 = vld [vmem:[%s192 + $0x30] sm:$0xf]
        %v246 = vld [vmem:[%s192 + $0x34] sm:$0xf]
        %v247 = vld [vmem:[%s192 + $0x38] sm:$0xf]
        %v248 = vld [vmem:[%s192 + $0x3c] sm:$0xf]
        %v265 = vunpack.c.l.b16 %v233
        %v266 = vunpack.c.l.b16 %v234
        %v267 = vunpack.c.l.b16 %v235
        %v268 = vunpack.c.l.b16 %v236
        %v269 = vunpack.c.l.b16 %v237
        %v270 = vunpack.c.l.b16 %v238
        %v271 = vunpack.c.l.b16 %v239
        %v272 = vunpack.c.l.b16 %v240
        %v273 = vunpack.c.l.b16 %v241
        %v274 = vunpack.c.l.b16 %v242
        %v275 = vunpack.c.l.b16 %v243
        %v276 = vunpack.c.l.b16 %v244
        %v277 = vunpack.c.l.b16 %v245
        %v278 = vunpack.c.l.b16 %v246
        %v279 = vunpack.c.l.b16 %v247
        %v280 = vunpack.c.l.b16 %v248
        %v281 = vpack.c.b16 %v266, %v265
        %v282 = vpack.c.b16 %v268, %v267
        %v283 = vpack.c.b16 %v270, %v269
        %v284 = vpack.c.b16 %v272, %v271
        %v285 = vpack.c.b16 %v274, %v273
        %v286 = vpack.c.b16 %v276, %v275
        %v287 = vpack.c.b16 %v278, %v277
        %v288 = vpack.c.b16 %v280, %v279
        %297 = vmatprep.subr.bf16.mxu0 0
        %298 = vmatpush1.bf16.msra.mxu0 %v288
        %299 = vmatprep.subr.bf16.mxu0 0
        %300 = vmatpush1.bf16.msra.mxu0 %v287
        %301 = vmatprep.subr.bf16.mxu0 0
        %302 = vmatpush1.bf16.msra.mxu0 %v286
        %303 = vmatprep.subr.bf16.mxu0 0
        %304 = vmatpush1.bf16.msra.mxu0 %v285
        %305 = vmatprep.subr.bf16.mxu0 0
        %306 = vmatpush1.bf16.msra.mxu0 %v284
        %307 = vmatprep.subr.bf16.mxu0 0
        %308 = vmatpush1.bf16.msra.mxu0 %v283
        %309 = vmatprep.subr.bf16.mxu0 0
        %310 = vmatpush1.bf16.msra.mxu0 %v282
        %311 = vmatprep.subr.bf16.mxu0 0
        %312 = vmatpush1.bf16.msra.mxu0 %v281
        %313 = vmatprep.subr.bf16.mxu0 0
        %314 = vmatpush2.bf16.msra.mxu0 0
        %315 = vmatprep.subr.bf16.mxu0 0
        %316 = vmatpush2.bf16.msra.mxu0 0
        %317 = vmatprep.subr.bf16.mxu0 0
        %318 = vmatpush2.bf16.msra.mxu0 0
        %319 = vmatprep.subr.bf16.mxu0 0
        %320 = vmatpush2.bf16.msra.mxu0 0
        %321 = vmatprep.subr.bf16.mxu0 0
        %322 = vmatpush2.bf16.msra.mxu0 0
        %323 = vmatprep.subr.bf16.mxu0 0
        %324 = vmatpush2.bf16.msra.mxu0 0
        %325 = vmatprep.subr.bf16.mxu0 0
        %326 = vmatpush2.bf16.msra.mxu0 0
        %327 = vmatprep.subr.bf16.mxu0 0
        %328 = vmatpush2.bf16.msra.mxu0 0
        %329 = vmatprep.mubr.bf16.mxu0 0
        %330 = vmatmul.mubr.bf16.gmra.mxu0 %v232
        %v331 = vpop.f32.mrf.mxu0
        %v332 = vadd.f32 0.0, %v331
        %v333 = vpop.f32.mrf.mxu0
        %v334 = vpop.f32.mrf.mxu0
        %v335 = vpop.f32.mrf.mxu0
        %336 = vdwg.mxu0
        %v337 = vrot.slane %v332, 4
        %v338 = vadd.f32 %v332, %v337
        %v339 = vrot.slane %v338, 2
        %v340 = vadd.f32 %v338, %v339
        %v341 = vrot.slane %v340, 1
        %v342 = vadd.f32 %v340, %v341
        %v343 = vrcp.pop 8.0
        %v344 = vmul.f32 %v342, %v343
        %v345 = vmul.f32 %v332, %v332
        %v346 = vrot.slane %v345, 4
        %v347 = vadd.f32 %v345, %v346
        %v348 = vrot.slane %v347, 2
        %v349 = vadd.f32 %v347, %v348
        %v350 = vrot.slane %v349, 1
        %v351 = vadd.f32 %v349, %v350
        %v352 = vmul.f32 %v351, %v343
        %v353 = vmul.f32 %v344, %v344
        %v354 = vsub.f32 %v352, %v353
        %v355 = vmax.f32 %v354, 0.0
        %v356 = vld [vmem:[%s201] sm:$0x1]
        %v357 = vadd.f32 %v355, 1e-05
        %v358 = vrsqrt.pop %v357
        %v359 = vmul.f32 %v356, %v358
        %v360 = vld [vmem:[%s201 + $0x1] sm:$0x1]
        %v361 = vmul.f32 %v344, %v359
        %v362 = vsub.f32 %v360, %v361
        %v363 = vlaneseq
        %v364 = vshrl.u32 %v363, 7
        %v365 = vsub.s32 0, %v364
        %v366 = vrot.slane %v359, %v365
        %v367 = vmul.f32 %v332, %v366
        %v368 = vlaneseq
        %v369 = vshrl.u32 %v368, 7
        %v370 = vsub.s32 0, %v369
        %v371 = vrot.slane %v362, %v370
        %v372 = vadd.f32 %v367, %v371
        %v373 = vmax.f32 %v372, 0.0
        %374 = vst [vmem:[#allocation2] sm:$0xff] %v373
        %p375 = scmp.eq.s32.totalorder %s19, 1
        // Predicated region
        $region49: #{tpu_custom_call.1} parent=31 // pred_check
          %p376 = pneg %p375
        $region50: #{tpu_custom_call.1} parent=31 // pred_check_branch
          %378 = sbr.rel (%p376) target = $region52
        $region51: #{tpu_custom_call.1} parent=31 // pred_region
          %379 = vst [vmem:[#allocation9] sm:$0xff] %v373
        $region52: #{tpu_custom_call.1} parent=31 // pred_fallthru
          _
        // Predicated region
        $region53: #{tpu_custom_call.1} parent=31 // pred_check
          %p380 = pneg %p105
        $region54: #{tpu_custom_call.1} parent=31 // pred_check_branch
          %382 = sbr.rel (%p380) target = $region56
        $region55: #{tpu_custom_call.1} parent=31 // pred_region
          %s384 = ssub.s32 128, 128
          %385 = vsyncadd [#allocation5], %s384
          %s387 = sshll.u32 [#allocation9], 4
          %s388 = int_to_ptr.vmem [resolvable:$true] %s387
          %390 = dma.vmem_to_hbm [thread:$0]  %s388, 128, %s3, [#allocation5]
        $region56: #{tpu_custom_call.1} parent=31 // pred_fallthru
          _
        // Predicated region
        $region57: #{tpu_custom_call.1} parent=31 // pred_check
          %p391 = pneg %p105
        $region58: #{tpu_custom_call.1} parent=31 // pred_check_branch
          %393 = sbr.rel (%p391) target = $region60
        $region59: #{tpu_custom_call.1} parent=31 // pred_region
          %394 = dma.done [#allocation5], 128
        $region60: #{tpu_custom_call.1} parent=31 // pred_fallthru
          _
      $region32: #{tpu_custom_call.1} parent=5 // pred_fallthru
        _
      %p395 = scmp.le.s32.totalorder 2, %s14
      // Predicated region
      $region61: #{tpu_custom_call.1} parent=5 // pred_check
        %p396 = pneg %p395
      $region62: #{tpu_custom_call.1} parent=5 // pred_check_branch
        %398 = sbr.rel (%p396) target = $region64
      $region63: #{tpu_custom_call.1} parent=5 // pred_region
        %s399 = ssub.s32 %s14, 2
      $region64: #{tpu_custom_call.1} parent=5 // pred_fallthru
        _
    $region6: #{tpu_custom_call.1} parent=1 // loop_footer
      %s18 = sadd.s32 1, %s14
    $region7: #{tpu_custom_call.1} parent=1 // loop_footer_branch
      %13 = sbr.rel target = $region3
    $region8: #{tpu_custom_call.1} parent=1 // loop_exit
      _
    %400 = vsyncpa [#allocation4], 1
    %s401 = scalar_lea.sflag [#allocation4], 1
    %402 = vsyncpa %s401, 1
    %403 = vsyncpa [#allocation7], 1
    %s404 = scalar_lea.sflag [#allocation7], 1
    %405 = vsyncpa %s404, 1
    %406 = vsyncpa [#allocation5], 1
    %s407 = scalar_lea.sflag [#allocation5], 1
    %408 = vsyncpa %s407, 1

</llo_original>
